<compile_context>
chip_gen: v7x
topology: tpu7x:2x2x1
jax: 0.10.0
libtpu: 0.0.40
codegen_flags: <defaults>
</compile_context>

<pallas_src>
import functools

import jax
import jax.numpy as jnp
from jax.experimental import pallas as pl
from jax.experimental.pallas import tpu as pltpu

LANE = 128                              # lane width of the 2-D slab
TARGET_BLOCK_BYTES = 2 * 1024 * 1024    # ~2 MiB input block regardless of dtype


def _cdiv(a: int, b: int) -> int:
    return -(-a // b)


def _round_up(a: int, b: int) -> int:
    return _cdiv(a, b) * b


def _memloss_kernel(x_ref, out_ref, *, tile_rows, rows_total, n_blocks, ragged):
    """Accumulate sum(w * log(w)) of this block into the resident (8,128) output."""
    i = pl.program_id(0)

    @pl.when(i == 0)
    def _init():
        out_ref[...] = jnp.zeros_like(out_ref)

    def _accumulate(mask_rows):
        w = x_ref[...].astype(jnp.float32)
        if mask_rows:
            # Final partial block only: rows at/after `rows_total` hold
            # unspecified data; force them (and exact zeros) to 1.0 so they
            # contribute exactly 0 to the sum.
            row_ids = jax.lax.broadcasted_iota(jnp.int32, (tile_rows, LANE), 0)
            base = (n_blocks - 1) * tile_rows            # static offset
            keep = jnp.logical_and((base + row_ids) < rows_total, w != 0.0)
            w = jnp.where(keep, w, 1.0)
        else:
            w = jnp.where(w == 0.0, 1.0, w)              # zeros -> 1.0 (log->0)
        # Fold the tile into an (8, 128) vector partial with VPU adds only.
        part = (w * jnp.log(w)).reshape(tile_rows // 8, 8, LANE).sum(axis=0)
        out_ref[...] += part

    if not ragged:
        _accumulate(False)
    else:
        if n_blocks > 1:
            @pl.when(i < n_blocks - 1)
            def _main():
                _accumulate(False)       # cheap path: no iota / row mask

        @pl.when(i == n_blocks - 1)
        def _tail():
            _accumulate(True)            # masked path: last (partial) block only


def mem_loss(att_weights: jax.Array, *,
             target_block_bytes: int = TARGET_BLOCK_BYTES) -> jax.Array:
    """Pallas implementation of MemLoss.forward. Returns a float32 scalar."""
    n_elems = att_weights.size
    if n_elems == 0:
        # torch.mean over an empty tensor is NaN.
        return jnp.float32(jnp.nan)

    flat = att_weights.reshape(-1)       # free reshape, keep native dtype
    rem = n_elems % LANE
    rows = n_elems // LANE

    # <=127-element lane tail handled in plain JAX (no full-tensor pad copy).
    if rem:
        tail = flat[n_elems - rem:].astype(jnp.float32)
        tail = jnp.where(tail == 0.0, 1.0, tail)
        tail_sum = jnp.sum(tail * jnp.log(tail))
    else:
        tail_sum = jnp.float32(0.0)

    if rows == 0:
        # Entire input fits in the tail expression.
        return -tail_sum / jnp.float32(n_elems)

    body = flat if rem == 0 else flat[: rows * LANE]
    slab = body.reshape(rows, LANE)      # lane-dense [rows, 128] view

    # Dtype-scaled block: ~target_block_bytes per block, sublane-aligned.
    itemsize = jnp.dtype(att_weights.dtype).itemsize
    sub_mult = max(8, 32 // max(1, itemsize))           # 8 / 16 / 32
    max_rows = max(sub_mult,
                   (target_block_bytes // (LANE * itemsize)) // sub_mult * sub_mult)
    tile_rows = min(max_rows, _round_up(rows, sub_mult))
    n_blocks = _cdiv(rows, tile_rows)
    ragged = (rows % tile_rows) != 0

    kernel = functools.partial(
        _memloss_kernel,
        tile_rows=tile_rows,
        rows_total=rows,
        n_blocks=n_blocks,
        ragged=ragged,
    )

    body_elems = rows * LANE
    cost = pl.CostEstimate(
        flops=4 * body_elems,            # cmp + select + mul + accumulate-add
        transcendentals=body_elems,      # log
        bytes_accessed=body_elems * itemsize + 8 * LANE * 4,
    )

    partials = pl.pallas_call(
        kernel,
        out_shape=jax.ShapeDtypeStruct((8, LANE), jnp.float32),
        grid_spec=pltpu.PrefetchScalarGridSpec(
            num_scalar_prefetch=0,
            grid=(n_blocks,),
            in_specs=[pl.BlockSpec((tile_rows, LANE), lambda i: (i, 0))],
            out_specs=pl.BlockSpec((8, LANE), lambda i: (0, 0)),
        ),
        compiler_params=pltpu.CompilerParams(
            dimension_semantics=("arbitrary",),
        ),
        cost_estimate=cost,
    )(slab)

    # Mean over the ORIGINAL element count (masked rows / tail padding add 0).
    total = jnp.sum(partials) + tail_sum
    return -total / jnp.float32(n_elems)


def _mem_loss_ref(att_weights: jax.Array) -> jax.Array:
    """Pure-JAX reference matching the PyTorch module."""
    w = att_weights.astype(jnp.float32)
    w = w + (w == 0).astype(jnp.float32) * 1.0
    return jnp.mean(-w * jnp.log(w))


if __name__ == "__main__":
    key = jax.random.PRNGKey(0)
    k1, k2, k3, k4, k5, k6 = jax.random.split(key, 6)

    # Attention-weight-like input (batch=2, heads=4, 16x16 map) with exact
    # zeros to exercise the (w == 0) -> 1.0 branch.  Lane-aligned (2048 elems).
    x = jax.random.uniform(k1, (2, 4, 16, 16), dtype=jnp.float32)
    x = jnp.where(jax.random.bernoulli(k2, 0.2, x.shape), 0.0, x)
    out = jax.block_until_ready(mem_loss(x))
    ref = _mem_loss_ref(x)
    assert jnp.allclose(out, ref, rtol=1e-4, atol=1e-6), (out, ref)

    # Ragged shape (numel not a multiple of 128): exercises the in-kernel
    # partial-row mask and the pure-JAX lane-tail path.
    y = jax.random.uniform(k3, (3, 5, 7, 11), dtype=jnp.float32)
    y = jnp.where(jax.random.bernoulli(k4, 0.3, y.shape), 0.0, y)
    out_y = jax.block_until_ready(mem_loss(y))
    ref_y = _mem_loss_ref(y)
    assert jnp.allclose(out_y, ref_y, rtol=1e-4, atol=1e-6), (out_y, ref_y)

    # Multi-block grid + ragged last block (artificially small block size).
    z = jax.random.uniform(k5, (8581,), dtype=jnp.float32)
    z = jnp.where(jax.random.bernoulli(k6, 0.1, z.shape), 0.0, z)
    out_z = jax.block_until_ready(mem_loss(z, target_block_bytes=8 * LANE * 4))
    ref_z = _mem_loss_ref(z)
    assert jnp.allclose(out_z, ref_z, rtol=1e-4, atol=1e-6), (out_z, ref_z)

    print("KERNEL_OK")
</pallas_src>

<mosaic_0001>
module attributes {stable_mosaic.version = 11 : i64} {
  func.func @_memloss_kernel(%arg0: i32, %arg1: memref<16x128xf32, #tpu.memory_space<vmem>>, %arg2: memref<8x128xf32, #tpu.memory_space<vmem>>) attributes {dimension_semantics = [#tpu.dimension_semantics<arbitrary>], iteration_bounds = array<i64: 1>, scalar_prefetch = 0 : i64, scratch_operands = 0 : i64, tpu.core_type = #tpu.core_type<tc>, window_params = [{transform_indices = @transform_0, window_bounds = array<i64: 16, 128>}, {pipeline_mode = #tpu.pipeline_mode<synchronous>, transform_indices = @transform_1, window_bounds = array<i64: 8, 128>}]} {
    %c0_i32 = arith.constant 0 : i32
    %0 = arith.cmpi eq, %arg0, %c0_i32 : i32
    %1 = arith.extui %0 : i1 to i32
    %c0_i32_0 = arith.constant 0 : i32
    %2 = arith.cmpi ne, %1, %c0_i32_0 : i32
    scf.if %2 {
      %cst_8 = arith.constant 0.000000e+00 : f32
      %15 = vector.broadcast %cst_8 : f32 to vector<8x128xf32>
      %c0_9 = arith.constant 0 : index
      %c0_10 = arith.constant 0 : index
      %16 = vector.load %arg2[%c0_9, %c0_10] : memref<8x128xf32, #tpu.memory_space<vmem>>, vector<8x128xf32>
      tpu.vector_store %arg2[%c0_9, %c0_10], %15 {strides = array<i32>} : memref<8x128xf32, #tpu.memory_space<vmem>>, vector<8x128xf32>,
    } else {
    }
    %c0 = arith.constant 0 : index
    %c0_1 = arith.constant 0 : index
    %3 = vector.load %arg1[%c0, %c0_1] : memref<16x128xf32, #tpu.memory_space<vmem>>, vector<16x128xf32>
    %cst = arith.constant 0.000000e+00 : f32
    %4 = vector.broadcast %cst : f32 to vector<16x128xf32>
    %5 = arith.cmpf oeq, %3, %4 : vector<16x128xf32>
    %cst_2 = arith.constant 1.000000e+00 : f32
    %6 = vector.broadcast %cst_2 : f32 to vector<16x128xf32>
    %7 = arith.select %5, %6, %3 : vector<16x128xi1>, vector<16x128xf32>
    %8 = math.log %7 : vector<16x128xf32>
    %9 = arith.mulf %7, %8 : vector<16x128xf32>
    %10 = vector.shape_cast %9 : vector<16x128xf32> to vector<2x8x128xf32>
    %cst_3 = arith.constant dense<0.000000e+00> : vector<8x128xf32>
    %11 = vector.multi_reduction <add>, %10, %cst_3 [0] : vector<2x8x128xf32> to vector<8x128xf32>
    %c0_4 = arith.constant 0 : index
    %c0_5 = arith.constant 0 : index
    %12 = vector.load %arg2[%c0_4, %c0_5] : memref<8x128xf32, #tpu.memory_space<vmem>>, vector<8x128xf32>
    %13 = arith.addf %12, %11 : vector<8x128xf32>
    %c0_6 = arith.constant 0 : index
    %c0_7 = arith.constant 0 : index
    %14 = vector.load %arg2[%c0_6, %c0_7] : memref<8x128xf32, #tpu.memory_space<vmem>>, vector<8x128xf32>
    tpu.vector_store %arg2[%c0_6, %c0_7], %13 {strides = array<i32>} : memref<8x128xf32, #tpu.memory_space<vmem>>, vector<8x128xf32>,
    return
  }
  func.func @transform_0(%arg0: i32) -> (i32, i32) {
    %c0_i32 = arith.constant 0 : i32
    %c0_i32_0 = arith.constant 0 : i32
    return %arg0, %c0_i32 : i32, i32
  }
  func.func @transform_1(%arg0: i32) -> (i32, i32) {
    %c0_i32 = arith.constant 0 : i32
    %c0_i32_0 = arith.constant 0 : i32
    %c0_i32_1 = arith.constant 0 : i32
    return %c0_i32, %c0_i32_0 : i32, i32
  }
}

</mosaic_0001>

<llo_original>
// kernel: tpu_custom_call.1
$region0: #{tpu_custom_call.1}
  #allocation0 [shape = 'u32[]', space=smem, size = 0x4, offset = 0x4, fixed_abs, tag = 'smem constant byte address 0x4 - core index']
  #allocation1 [shape = 'u32[144,128]{1,0:T(1,128)}', space=vmem, size = 0x12000, scoped, tag = 'internal scratch']
  %s0 = inlined_call_operand.hbm [shape: f32[16,128], index: 0, kind: input, shape index: {}]
  %s1 = inlined_call_operand.hbm [shape: f32[8,128], index: 1, kind: output, shape index: {}]
  %s2 = sld [smem:[#allocation0]]
  $region22: #{tpu_custom_call.1} parent=0
    _
  %s4 = ssub.s32 1, %s2
  %s5 = scalar_select 0, %s4, %s2
  $region1: #{tpu_custom_call.1} parent=0
    #allocation2 [shape = 'u8[8192]{0}', space=vmem, size = 0x2000, scoped, tag = 'input window, operand 0, single buffered']
    #allocation3 [shape = 's32[1]{0}', space=sflag, size = 0x4, scoped, tag = 'scoped memory for tpu_custom_call.1']
    #allocation4 [shape = 's32[1]{0}', space=sflag, size = 0x4, scoped, tag = 'scoped memory for tpu_custom_call.1']
    #allocation5 [shape = 'u8[4096]{0}', space=vmem, size = 0x1000, scoped, tag = 'output window, operand 0, single buffered']
    %6 = vsyncpa [#allocation3], 0
    %7 = vsyncpa [#allocation4], 0
    // Predicated region
    $region2: #{tpu_custom_call.1} parent=1 // pred_check
      _
    $region3: #{tpu_custom_call.1} parent=1 // pred_check_branch
      %9 = sbr.rel (0) target = $region5
    $region4: #{tpu_custom_call.1} parent=1 // pred_region
      %s11 = ssub.s32 256, 256
      %12 = vsyncadd [#allocation3], %s11
      %s13 = sshll.u32 [#allocation2], 4
      %s14 = int_to_ptr.vmem [resolvable:$true] %s13
      %19 = dma.hbm_to_vmem [thread:$0]  %s0, 256, %s14, [#allocation3], 128, 128, 8
    $region5: #{tpu_custom_call.1} parent=1 // pred_fallthru
      _
    // Predicated region
    $region6: #{tpu_custom_call.1} parent=1 // pred_check
      _
    $region7: #{tpu_custom_call.1} parent=1 // pred_check_branch
      %21 = sbr.rel (0) target = $region9
    $region8: #{tpu_custom_call.1} parent=1 // pred_region
      %22 = dma.done [#allocation3], 256
    $region9: #{tpu_custom_call.1} parent=1 // pred_fallthru
      _
    %p23 = scmp.eq.s32.totalorder 0, 0
    // Predicated region
    $region10: #{tpu_custom_call.1} parent=1 // pred_check
      %p24 = pneg %p23
    $region11: #{tpu_custom_call.1} parent=1 // pred_check_branch
      %26 = sbr.rel (%p24) target = $region13
    $region12: #{tpu_custom_call.1} parent=1 // pred_region
      %27 = vst [vmem:[#allocation5] sm:$0xff] 0.0
    $region13: #{tpu_custom_call.1} parent=1 // pred_fallthru
      _
    %v28 = vld [vmem:[#allocation2] sm:$0xff]
    %v29 = vld [vmem:[#allocation2 + $0x8] sm:$0xff]
    %vm30 = vcmp.eq.f32.partialorder %v28, 0.0
    %vm31 = vcmp.eq.f32.partialorder %v29, 0.0
    %v32 = vsel %vm30, 1.0, %v28
    %v33 = vsel %vm31, 1.0, %v29
    %v34 = vlog2.pop %v32
    %v35 = vmul.f32 %v34, 0.6931472
    %v36 = vlog2.pop %v33
    %v37 = vmul.f32 %v36, 0.6931472
    %v38 = vmul.f32 %v32, %v35
    %v39 = vmul.f32 %v33, %v37
    %v40 = vadd.f32 %v38, %v39
    %v41 = vld [vmem:[#allocation5] sm:$0xff]
    %v42 = vadd.f32 %v41, %v40
    %43 = vst [vmem:[#allocation5] sm:$0xff] %v42
    // Predicated region
    $region14: #{tpu_custom_call.1} parent=1 // pred_check
      _
    $region15: #{tpu_custom_call.1} parent=1 // pred_check_branch
      %45 = sbr.rel (0) target = $region17
    $region16: #{tpu_custom_call.1} parent=1 // pred_region
      %s47 = ssub.s32 128, 128
      %48 = vsyncadd [#allocation4], %s47
      %s50 = sshll.u32 [#allocation5], 4
      %s51 = int_to_ptr.vmem [resolvable:$true] %s50
      %53 = dma.vmem_to_hbm [thread:$0]  %s51, 128, %s1, [#allocation4]
    $region17: #{tpu_custom_call.1} parent=1 // pred_fallthru
      _
    // Predicated region
    $region18: #{tpu_custom_call.1} parent=1 // pred_check
      _
    $region19: #{tpu_custom_call.1} parent=1 // pred_check_branch
      %55 = sbr.rel (0) target = $region21
    $region20: #{tpu_custom_call.1} parent=1 // pred_region
      %56 = dma.done [#allocation4], 128
    $region21: #{tpu_custom_call.1} parent=1 // pred_fallthru
      _
    %57 = vsyncpa [#allocation3], 1
    %58 = vsyncpa [#allocation4], 1

</llo_original>
